<compile_context>
chip_gen: v5e
topology: v5e:2x2
jax: 0.10.0
libtpu: 0.0.40
codegen_flags: <defaults>
</compile_context>

<pallas_src>
import functools

import jax
import jax.numpy as jnp
from jax.experimental import pallas as pl
from jax.experimental.pallas import tpu as pltpu

LANE = 128      # vreg lane width  (last dim)
SUBLANE = 8     # vreg sublane width (second-to-last dim, f32)


def _round_up(n: int, m: int) -> int:
    return ((n + m - 1) // m) * m


def _next_pow2(n: int) -> int:
    return 1 << max(0, (n - 1).bit_length())


def mlp_kernel(x_ref, w1_ref, b1_ref, w2_ref, b2_ref, o_ref):
    """Fused 2-layer MLP tile: o = relu(x @ W1t + b1) @ W2t + b2."""
    # Cast activations to the weight dtype so bf16 weights drive the bf16 MXU
    # path on v6e/v7x; accumulation stays f32 via preferred_element_type.
    xv = x_ref[...].astype(w1_ref.dtype)
    h = jnp.dot(xv, w1_ref[...], preferred_element_type=jnp.float32)
    h = jnp.maximum(h + b1_ref[...].astype(jnp.float32), 0.0)
    y = jnp.dot(h.astype(w2_ref.dtype), w2_ref[...],
                preferred_element_type=jnp.float32)
    o_ref[...] = (y + b2_ref[...].astype(jnp.float32)).astype(o_ref.dtype)


def prepare_params(w1, b1, w2, b2, weight_dtype=None):
    """One-time preprocessing of PyTorch-layout params.

    w1: (hidden, in), b1: (hidden,), w2: (out, hidden), b2: (out,)
    Weights are transposed and lane-padded on their N dims (hidden / out);
    the K dim of W1 is left at its true width so x needs no lane padding.
    Biases stay float32 (they feed the f32 epilogue).
    """
    hidden, in_f = w1.shape
    out = w2.shape[0]
    wd = jnp.dtype(weight_dtype) if weight_dtype is not None else jnp.dtype(w1.dtype)
    hid_p = _round_up(hidden, LANE)
    out_p = _round_up(out, LANE)

    w1t = jnp.zeros((in_f, hid_p), wd).at[:, :hidden].set(w1.T.astype(wd))
    b1p = jnp.zeros((1, hid_p), jnp.float32).at[0, :hidden].set(b1.astype(jnp.float32))
    w2t = jnp.zeros((hid_p, out_p), wd).at[:hidden, :out].set(w2.T.astype(wd))
    b2p = jnp.zeros((1, out_p), jnp.float32).at[0, :out].set(b2.astype(jnp.float32))

    return {
        "w1t": w1t, "b1": b1p, "w2t": w2t, "b2": b2p,
        "in_features": in_f, "hidden_features": hidden, "out_features": out,
    }


@functools.partial(jax.jit, static_argnames=("dims",))
def _forward_jit(x, w1t, b1p, w2t, b2p, *, dims):
    in_f, hidden, out = dims
    B = x.shape[0]
    hid_p = w1t.shape[1]
    out_p = w2t.shape[1]

    # Bucketed batch tiling: tm is a power of two (<=256); large batches get a
    # parallel grid over batch tiles (v7x: 2 TensorCores share the work).
    tm = min(256, _next_pow2(max(B, SUBLANE)))
    Bp = _round_up(B, tm)
    x_pad = x if Bp == B else jnp.zeros((Bp, in_f), x.dtype).at[:B].set(x)
    grid = (Bp // tm,)

    def _isz(a):
        return jnp.dtype(a.dtype).itemsize

    # Advisory cost from TRUE (unpadded) dims and per-operand itemsizes.
    cost = pl.CostEstimate(
        flops=2 * B * in_f * hidden + 2 * B * hidden * out,
        transcendentals=0,
        bytes_accessed=(B * in_f * _isz(x)
                        + (in_f * hidden + hidden) * _isz(w1t)
                        + (hidden * out + out) * _isz(w2t)
                        + B * out * _isz(x)),
    )

    # Explicit VMEM budget: all resident blocks, x2.5 for double buffering +
    # headroom, floored at 8 MiB for compiler scratch, capped at 100 MiB.
    block_bytes = (tm * in_f * _isz(x)
                   + w1t.size * _isz(w1t) + b1p.size * _isz(b1p)
                   + w2t.size * _isz(w2t) + b2p.size * _isz(b2p)
                   + tm * out_p * _isz(x))
    vmem_limit = min(100 << 20, max(8 << 20, int(2.5 * block_bytes)))
    # TODO(synk): once the resident-weight footprint approaches v7x's 64 MiB
    # VMEM, switch to a (batch x out)-tiled grid with a K-inner loop and an
    # f32 accumulator scratch instead of the weights-resident layout.

    out_pad = pl.pallas_call(
        mlp_kernel,
        out_shape=jax.ShapeDtypeStruct((Bp, out_p), x.dtype),
        grid=grid,
        in_specs=[
            pl.BlockSpec((tm, in_f), lambda i: (i, 0)),      # x: per-batch-tile
            pl.BlockSpec((in_f, hid_p), lambda i: (0, 0)),   # W1t: resident
            pl.BlockSpec((1, hid_p), lambda i: (0, 0)),      # b1: resident
            pl.BlockSpec((hid_p, out_p), lambda i: (0, 0)),  # W2t: resident
            pl.BlockSpec((1, out_p), lambda i: (0, 0)),      # b2: resident
        ],
        out_specs=pl.BlockSpec((tm, out_p), lambda i: (i, 0)),
        compiler_params=pltpu.CompilerParams(
            dimension_semantics=("parallel",),
            vmem_limit_bytes=vmem_limit,
            allow_input_fusion=[True, False, False, False, False],
        ),
        cost_estimate=cost,
    )(x_pad, w1t, b1p, w2t, b2p)

    # Slice off batch / output-lane padding inside the same XLA program.
    return out_pad[:B, :out]


def neural_network_forward(x, params):
    """x: (B, in_features). params: output of prepare_params()."""
    assert x.shape[1] == params["in_features"]
    return _forward_jit(
        x, params["w1t"], params["b1"], params["w2t"], params["b2"],
        dims=(params["in_features"], params["hidden_features"],
              params["out_features"]))


def init_linear_params(key, in_features, out_features, dtype=jnp.float32):
    """Mirrors nn.Linear's default U(-1/sqrt(in), 1/sqrt(in)) init."""
    k_w, k_b = jax.random.split(key)
    bound = 1.0 / (in_features ** 0.5)
    w = jax.random.uniform(k_w, (out_features, in_features), dtype,
                           minval=-bound, maxval=bound)
    b = jax.random.uniform(k_b, (out_features,), dtype,
                           minval=-bound, maxval=bound)
    return w, b


if __name__ == "__main__":
    # Shapes implied by the module: (batch, input_size) -> hidden -> output.
    batch, input_size, hidden_size, output_size = 8, 32, 64, 16

    key = jax.random.PRNGKey(0)
    k_x, k_l1, k_l2 = jax.random.split(key, 3)

    x = jax.random.normal(k_x, (batch, input_size), jnp.float32)
    w1, b1 = init_linear_params(k_l1, input_size, hidden_size)
    w2, b2 = init_linear_params(k_l2, hidden_size, output_size)

    # Pure-JAX reference (same math as the PyTorch forward).
    ref = jnp.maximum(x @ w1.T + b1, 0.0) @ w2.T + b2

    # f32 weights: exact path (and the only full-rate MXU dtype check on v5e).
    params_f32 = prepare_params(w1, b1, w2, b2)
    y_f32 = neural_network_forward(x, params_f32)
    jax.block_until_ready(y_f32)
    assert y_f32.shape == (batch, output_size)
    assert jnp.allclose(y_f32, ref, atol=1e-5, rtol=1e-5), "f32 mismatch vs reference"

    # bf16 weights: v6e/v7x-native MXU path, f32 accumulation in-kernel.
    params_bf16 = prepare_params(w1, b1, w2, b2, weight_dtype=jnp.bfloat16)
    y_bf16 = neural_network_forward(x, params_bf16)
    jax.block_until_ready(y_bf16)
    assert y_bf16.shape == (batch, output_size)
    assert jnp.allclose(y_bf16, ref, atol=5e-2, rtol=5e-2), "bf16 mismatch vs reference"

    print("KERNEL_OK")
</pallas_src>

<mosaic_0001>
module attributes {stable_mosaic.version = 11 : i64} {
  func.func @mlp_kernel(%arg0: i32, %arg1: memref<8x32xf32, #tpu.memory_space<vmem>>, %arg2: memref<32x128xf32, #tpu.memory_space<vmem>>, %arg3: memref<1x128xf32, #tpu.memory_space<vmem>>, %arg4: memref<128x128xf32, #tpu.memory_space<vmem>>, %arg5: memref<1x128xf32, #tpu.memory_space<vmem>>, %arg6: memref<8x128xf32, #tpu.memory_space<vmem>>) attributes {dimension_semantics = [#tpu.dimension_semantics<parallel>], iteration_bounds = array<i64: 1>, scalar_prefetch = 0 : i64, scratch_operands = 0 : i64, tpu.core_type = #tpu.core_type<tc>, window_params = [{transform_indices = @transform_0, window_bounds = array<i64: 8, 32>}, {pipeline_mode = #tpu.pipeline_mode<synchronous>, transform_indices = @transform_1, window_bounds = array<i64: 32, 128>}, {pipeline_mode = #tpu.pipeline_mode<synchronous>, transform_indices = @transform_2, window_bounds = array<i64: 1, 128>}, {pipeline_mode = #tpu.pipeline_mode<synchronous>, transform_indices = @transform_3, window_bounds = array<i64: 128, 128>}, {pipeline_mode = #tpu.pipeline_mode<synchronous>, transform_indices = @transform_4, window_bounds = array<i64: 1, 128>}, {transform_indices = @transform_5, window_bounds = array<i64: 8, 128>}]} {
    %c0 = arith.constant 0 : index
    %c0_0 = arith.constant 0 : index
    %0 = vector.load %arg1[%c0, %c0_0] : memref<8x32xf32, #tpu.memory_space<vmem>>, vector<8x32xf32>
    %c0_1 = arith.constant 0 : index
    %c0_2 = arith.constant 0 : index
    %1 = vector.load %arg2[%c0_1, %c0_2] : memref<32x128xf32, #tpu.memory_space<vmem>>, vector<32x128xf32>
    %cst = arith.constant dense<0.000000e+00> : vector<8x128xf32>
    %2 = tpu.matmul %0, %1, %cst {dimension_numbers = #tpu.dot_dimension_numbers<[1], [0], [0], [1], [0, 0, 1, 1], [], []>} : vector<8x32xf32>, vector<32x128xf32>, vector<8x128xf32> -> vector<8x128xf32>
    %c0_3 = arith.constant 0 : index
    %c0_4 = arith.constant 0 : index
    %3 = vector.load %arg3[%c0_3, %c0_4] : memref<1x128xf32, #tpu.memory_space<vmem>>, vector<1x128xf32>
    %4 = vector.broadcast %3 : vector<1x128xf32> to vector<8x128xf32>
    %5 = arith.addf %2, %4 : vector<8x128xf32>
    %cst_5 = arith.constant 0.000000e+00 : f32
    %6 = vector.broadcast %cst_5 : f32 to vector<8x128xf32>
    %7 = arith.maximumf %5, %6 : vector<8x128xf32>
    %c0_6 = arith.constant 0 : index
    %c0_7 = arith.constant 0 : index
    %8 = vector.load %arg4[%c0_6, %c0_7] : memref<128x128xf32, #tpu.memory_space<vmem>>, vector<128x128xf32>
    %cst_8 = arith.constant dense<0.000000e+00> : vector<8x128xf32>
    %9 = tpu.matmul %7, %8, %cst_8 {dimension_numbers = #tpu.dot_dimension_numbers<[1], [0], [0], [1], [0, 0, 1, 1], [], []>} : vector<8x128xf32>, vector<128x128xf32>, vector<8x128xf32> -> vector<8x128xf32>
    %c0_9 = arith.constant 0 : index
    %c0_10 = arith.constant 0 : index
    %10 = vector.load %arg5[%c0_9, %c0_10] : memref<1x128xf32, #tpu.memory_space<vmem>>, vector<1x128xf32>
    %11 = vector.broadcast %10 : vector<1x128xf32> to vector<8x128xf32>
    %12 = arith.addf %9, %11 : vector<8x128xf32>
    %c0_11 = arith.constant 0 : index
    %c0_12 = arith.constant 0 : index
    %13 = vector.load %arg6[%c0_11, %c0_12] : memref<8x128xf32, #tpu.memory_space<vmem>>, vector<8x128xf32>
    tpu.vector_store %arg6[%c0_11, %c0_12], %12 {strides = array<i32>} : memref<8x128xf32, #tpu.memory_space<vmem>>, vector<8x128xf32>,
    return
  }
  func.func @transform_0(%arg0: i32) -> (i32, i32) {
    %c0_i32 = arith.constant 0 : i32
    %c0_i32_0 = arith.constant 0 : i32
    return %arg0, %c0_i32 : i32, i32
  }
  func.func @transform_1(%arg0: i32) -> (i32, i32) {
    %c0_i32 = arith.constant 0 : i32
    %c0_i32_0 = arith.constant 0 : i32
    %c0_i32_1 = arith.constant 0 : i32
    return %c0_i32, %c0_i32_0 : i32, i32
  }
  func.func @transform_2(%arg0: i32) -> (i32, i32) {
    %c0_i32 = arith.constant 0 : i32
    %c0_i32_0 = arith.constant 0 : i32
    %c0_i32_1 = arith.constant 0 : i32
    return %c0_i32, %c0_i32_0 : i32, i32
  }
  func.func @transform_3(%arg0: i32) -> (i32, i32) {
    %c0_i32 = arith.constant 0 : i32
    %c0_i32_0 = arith.constant 0 : i32
    %c0_i32_1 = arith.constant 0 : i32
    return %c0_i32, %c0_i32_0 : i32, i32
  }
  func.func @transform_4(%arg0: i32) -> (i32, i32) {
    %c0_i32 = arith.constant 0 : i32
    %c0_i32_0 = arith.constant 0 : i32
    %c0_i32_1 = arith.constant 0 : i32
    return %c0_i32, %c0_i32_0 : i32, i32
  }
  func.func @transform_5(%arg0: i32) -> (i32, i32) {
    %c0_i32 = arith.constant 0 : i32
    %c0_i32_0 = arith.constant 0 : i32
    return %arg0, %c0_i32 : i32, i32
  }
}

</mosaic_0001>

<llo_original>
// kernel: _forward_jit.1
$region0: #{_forward_jit.1}
  #allocation0 [shape = 'u32[]', space=smem, size = 0x4, offset = 0x4, fixed_abs, tag = 'smem constant byte address 0x4 - core index']
  #allocation1 [shape = 'u32[72,128]{1,0:T(1,128)}', space=vmem, size = 0x9000, scoped, tag = 'internal scratch']
  %s0 = inlined_call_operand.hbm [shape: f32[8,32], index: 0, kind: input, shape index: {}]
  %s1 = inlined_call_operand.hbm [shape: f32[32,128], index: 1, kind: input, shape index: {}]
  %s2 = inlined_call_operand.vmem [shape: f32[1,128], index: 2, kind: input, shape index: {}]
  %s3 = inlined_call_operand.hbm [shape: f32[128,128], index: 3, kind: input, shape index: {}]
  %s4 = inlined_call_operand.vmem [shape: f32[1,128], index: 4, kind: input, shape index: {}]
  %s5 = inlined_call_operand.hbm [shape: f32[8,128], index: 5, kind: output, shape index: {}]
  %s6 = sld [smem:[#allocation0]]
  $region42: #{_forward_jit.1} parent=0
    _
  %s8 = ssub.s32 1, %s6
  %s9 = scalar_select 0, %s8, %s6
  $region1: #{_forward_jit.1} parent=0
    #allocation2 [shape = 'u8[4096]{0}', space=vmem, size = 0x1000, scoped, tag = 'input window, operand 0, single buffered']
    #allocation3 [shape = 's32[1]{0}', space=sflag, size = 0x4, scoped, tag = 'scoped memory for _forward_jit.1']
    #allocation4 [shape = 's32[1]{0}', space=sflag, size = 0x4, scoped, tag = 'scoped memory for _forward_jit.1']
    #allocation5 [shape = 'u8[16384]{0}', space=vmem, size = 0x4000, scoped, tag = 'input window, operand 1, single buffered']
    #allocation6 [shape = 's32[1]{0}', space=sflag, size = 0x4, scoped, tag = 'scoped memory for _forward_jit.1']
    #allocation7 [shape = 'u8[65536]{0}', space=vmem, size = 0x10000, scoped, tag = 'input window, operand 3, single buffered']
    #allocation8 [shape = 'u8[4096]{0}', space=vmem, size = 0x1000, scoped, tag = 'output window, operand 0, single buffered']
    %10 = vsyncpa [#allocation3], 0
    %11 = vsyncpa [#allocation6], 0
    %12 = vsyncpa [#allocation4], 0
    // Predicated region
    $region2: #{_forward_jit.1} parent=1 // pred_check
      _
    $region3: #{_forward_jit.1} parent=1 // pred_check_branch
      %14 = sbr.rel (0) target = $region5
    $region4: #{_forward_jit.1} parent=1 // pred_region
      %16 = vsyncadd [#allocation3], 0
      %s18 = sshll.u32 %s0, 4
      %s19 = int_to_ptr.hbm [resolvable:$true] %s18
      %s20 = sshll.u32 [#allocation2], 4
      %s21 = int_to_ptr.vmem [resolvable:$true] %s20
      %23 = dma.hbm_to_vmem [thread:$0]  %s19, 128, %s21, [#allocation3]
    $region5: #{_forward_jit.1} parent=1 // pred_fallthru
      _
    // Predicated region
    $region6: #{_forward_jit.1} parent=1 // pred_check
      _
    $region7: #{_forward_jit.1} parent=1 // pred_check_branch
      %25 = sbr.rel (0) target = $region9
    $region8: #{_forward_jit.1} parent=1 // pred_region
      %27 = vsyncadd [#allocation6], 0
      %s28 = sshll.u32 %s1, 4
      %s29 = int_to_ptr.hbm [resolvable:$true] %s28
      %s30 = sshll.u32 [#allocation5], 4
      %s31 = int_to_ptr.vmem [resolvable:$true] %s30
      %36 = dma.hbm_to_vmem [thread:$0]  %s29, 512, %s31, [#allocation6], 128, 128, 8
    $region9: #{_forward_jit.1} parent=1 // pred_fallthru
      _
    // Predicated region
    $region10: #{_forward_jit.1} parent=1 // pred_check
      _
    $region11: #{_forward_jit.1} parent=1 // pred_check_branch
      %38 = sbr.rel (0) target = $region13
    $region12: #{_forward_jit.1} parent=1 // pred_region
      _
    $region13: #{_forward_jit.1} parent=1 // pred_fallthru
      _
    // Predicated region
    $region14: #{_forward_jit.1} parent=1 // pred_check
      _
    $region15: #{_forward_jit.1} parent=1 // pred_check_branch
      %40 = sbr.rel (0) target = $region17
    $region16: #{_forward_jit.1} parent=1 // pred_region
      %42 = vsyncadd [#allocation6], 0
      %s43 = sshll.u32 %s3, 4
      %s44 = int_to_ptr.hbm [resolvable:$true] %s43
      %s45 = sshll.u32 [#allocation7], 4
      %s46 = int_to_ptr.vmem [resolvable:$true] %s45
      %51 = dma.hbm_to_vmem [thread:$0]  %s44, 2048, %s46, [#allocation6], 128, 128, 8
    $region17: #{_forward_jit.1} parent=1 // pred_fallthru
      _
    // Predicated region
    $region18: #{_forward_jit.1} parent=1 // pred_check
      _
    $region19: #{_forward_jit.1} parent=1 // pred_check_branch
      %53 = sbr.rel (0) target = $region21
    $region20: #{_forward_jit.1} parent=1 // pred_region
      _
    $region21: #{_forward_jit.1} parent=1 // pred_fallthru
      _
    // Predicated region
    $region22: #{_forward_jit.1} parent=1 // pred_check
      _
    $region23: #{_forward_jit.1} parent=1 // pred_check_branch
      %55 = sbr.rel (0) target = $region25
    $region24: #{_forward_jit.1} parent=1 // pred_region
      %57 = dma.done [#allocation3], 128
    $region25: #{_forward_jit.1} parent=1 // pred_fallthru
      _
    // Predicated region
    $region26: #{_forward_jit.1} parent=1 // pred_check
      _
    $region27: #{_forward_jit.1} parent=1 // pred_check_branch
      %59 = sbr.rel (0) target = $region29
    $region28: #{_forward_jit.1} parent=1 // pred_region
      %61 = dma.done [#allocation6], 512
    $region29: #{_forward_jit.1} parent=1 // pred_fallthru
      _
    // Predicated region
    $region30: #{_forward_jit.1} parent=1 // pred_check
      _
    $region31: #{_forward_jit.1} parent=1 // pred_check_branch
      %63 = sbr.rel (0) target = $region33
    $region32: #{_forward_jit.1} parent=1 // pred_region
      %65 = dma.done [#allocation6], 2048
    $region33: #{_forward_jit.1} parent=1 // pred_fallthru
      _
    %v66 = vld [vmem:[#allocation2] sm:$0xff]
    %v67 = vld [vmem:[#allocation5] sm:$0xff]
    %v68 = vld [vmem:[#allocation5 + $0x8] sm:$0xff]
    %v69 = vld [vmem:[#allocation5 + $0x10] sm:$0xff]
    %v70 = vld [vmem:[#allocation5 + $0x18] sm:$0xff]
    %v71 = vld [vmem:[%s2] sm:$0x1]
    %v73 = vperm.slane %v71, 0
    %vm75 = vcmask 261120
    %v77 = vsel %vm75, %v66, 0
    %79 = vmatpush.msra.mxu0 0.0
    %80 = vmatpush.msra.mxu0 0.0
    %81 = vmatpush.msra.mxu0 0.0
    %82 = vmatpush.msra.mxu0 0.0
    %83 = vmatpush.msra.mxu0 0.0
    %84 = vmatpush.msra.mxu0 0.0
    %85 = vmatpush.msra.mxu0 0.0
    %86 = vmatpush.msra.mxu0 0.0
    %87 = vmatpush.msra.mxu0 0.0
    %88 = vmatpush.msra.mxu0 0.0
    %89 = vmatpush.msra.mxu0 0.0
    %90 = vmatpush.msra.mxu0 0.0
    %91 = vmatpush.msra.mxu0 %v70
    %92 = vmatpush.msra.mxu0 %v69
    %93 = vmatpush.msra.mxu0 %v68
    %94 = vmatpush.msra.mxu0 %v67
    %95 = vmatmul.f32.gmra.mxu0 %v77
    %v96 = vpop.f32.mrf.mxu0
    %v97 = vadd.f32 %v73, %v96
    %98 = vdwg.mxu0
    %v99 = vmax.f32 %v97, 0.0
    %v100 = vld [vmem:[#allocation7] sm:$0xff]
    %v101 = vld [vmem:[#allocation7 + $0x8] sm:$0xff]
    %v102 = vld [vmem:[#allocation7 + $0x10] sm:$0xff]
    %v103 = vld [vmem:[#allocation7 + $0x18] sm:$0xff]
    %v104 = vld [vmem:[#allocation7 + $0x20] sm:$0xff]
    %v105 = vld [vmem:[#allocation7 + $0x28] sm:$0xff]
    %v106 = vld [vmem:[#allocation7 + $0x30] sm:$0xff]
    %v107 = vld [vmem:[#allocation7 + $0x38] sm:$0xff]
    %v108 = vld [vmem:[#allocation7 + $0x40] sm:$0xff]
    %v109 = vld [vmem:[#allocation7 + $0x48] sm:$0xff]
    %v110 = vld [vmem:[#allocation7 + $0x50] sm:$0xff]
    %v111 = vld [vmem:[#allocation7 + $0x58] sm:$0xff]
    %v112 = vld [vmem:[#allocation7 + $0x60] sm:$0xff]
    %v113 = vld [vmem:[#allocation7 + $0x68] sm:$0xff]
    %v114 = vld [vmem:[#allocation7 + $0x70] sm:$0xff]
    %v115 = vld [vmem:[#allocation7 + $0x78] sm:$0xff]
    %v116 = vld [vmem:[%s4] sm:$0x1]
    %v118 = vperm.slane %v116, 0
    %120 = vmatpush.msra.mxu0 %v115
    %121 = vmatpush.msra.mxu0 %v114
    %122 = vmatpush.msra.mxu0 %v113
    %123 = vmatpush.msra.mxu0 %v112
    %124 = vmatpush.msra.mxu0 %v111
    %125 = vmatpush.msra.mxu0 %v110
    %126 = vmatpush.msra.mxu0 %v109
    %127 = vmatpush.msra.mxu0 %v108
    %128 = vmatpush.msra.mxu0 %v107
    %129 = vmatpush.msra.mxu0 %v106
    %130 = vmatpush.msra.mxu0 %v105
    %131 = vmatpush.msra.mxu0 %v104
    %132 = vmatpush.msra.mxu0 %v103
    %133 = vmatpush.msra.mxu0 %v102
    %134 = vmatpush.msra.mxu0 %v101
    %135 = vmatpush.msra.mxu0 %v100
    %136 = vmatmul.f32.gmra.mxu0 %v99
    %v137 = vpop.f32.mrf.mxu0
    %v138 = vadd.f32 %v118, %v137
    %139 = vdwg.mxu0
    %140 = vst [vmem:[#allocation8] sm:$0xff] %v138
    // Predicated region
    $region34: #{_forward_jit.1} parent=1 // pred_check
      _
    $region35: #{_forward_jit.1} parent=1 // pred_check_branch
      %142 = sbr.rel (0) target = $region37
    $region36: #{_forward_jit.1} parent=1 // pred_region
      %144 = vsyncadd [#allocation4], 0
      %s146 = sshll.u32 [#allocation8], 4
      %s147 = int_to_ptr.vmem [resolvable:$true] %s146
      %s148 = sshll.u32 %s5, 4
      %s149 = int_to_ptr.hbm [resolvable:$true] %s148
      %151 = dma.vmem_to_hbm [thread:$0]  %s147, 128, %s149, [#allocation4]
    $region37: #{_forward_jit.1} parent=1 // pred_fallthru
      _
    // Predicated region
    $region38: #{_forward_jit.1} parent=1 // pred_check
      _
    $region39: #{_forward_jit.1} parent=1 // pred_check_branch
      %153 = sbr.rel (0) target = $region41
    $region40: #{_forward_jit.1} parent=1 // pred_region
      %155 = dma.done [#allocation4], 128
    $region41: #{_forward_jit.1} parent=1 // pred_fallthru
      _
    %156 = vsyncpa [#allocation3], 1
    %157 = vsyncpa [#allocation6], 1
    %158 = vsyncpa [#allocation4], 1

</llo_original>
